<compile_context>
chip_gen: v6e
topology: v6e:2x2x1
jax: 0.10.0
libtpu: 0.0.40
codegen_flags: <defaults>
</compile_context>

<pallas_src>
import functools

import jax
import jax.numpy as jnp
from jax.experimental import pallas as pl
from jax.experimental.pallas import tpu as pltpu


def _pos_enc_kernel(x_ref, emb_ref, o_ref):
    # x_ref / o_ref: (TB, TL) tile of the flattened input / output.
    # emb_ref:       (1, TL)  tile of the flattened positional embeddings,
    #                broadcast over the batch rows of the tile.
    o_ref[...] = x_ref[...] + emb_ref[...]


def _choose_tiles(batch, lanes, itemsize, target_bytes=2 << 20):
    """Pick (TB, TL): ~target_bytes per block, honoring (8, 128) tiling rules."""
    # Lane tile: full width if it fits (always legal), else the largest
    # multiple-of-128 divisor of `lanes` that fits the budget.
    if lanes * itemsize <= target_bytes or lanes % 128 != 0:
        tl = lanes
    else:
        max_lanes = max(128, ((target_bytes // itemsize) // 128) * 128)
        tl = 128
        cand = 128
        while cand <= min(lanes, max_lanes):
            if lanes % cand == 0:
                tl = cand
            cand += 128
    # Batch (sublane) tile: whole batch if it fits, else the largest
    # multiple-of-8 divisor of `batch` that fits the budget.
    row_bytes = tl * itemsize
    max_rows = max(1, target_bytes // row_bytes)
    if batch <= max_rows:
        tb = batch
    else:
        tb = 0
        cand = 8
        while cand <= max_rows:
            if batch % cand == 0:
                tb = cand
            cand += 8
        if tb == 0:
            tb = batch  # fallback: one (larger) block over batch; still correct
    return tb, tl


@functools.partial(jax.jit, static_argnames=("batched",))
def positional_encoding_forward(x, emb_weight, batched=True):
    """Adds positional embeddings to x.

    :param x: [B, S, D] if batched else [S, D]
    :param emb_weight: [num_positions, D] embedding table
    :return: tensor of the same shape as x
    """
    x3 = x if batched else x[None, :, :]
    B, S, D = x3.shape
    num_positions = emb_weight.shape[0]
    if S > num_positions:
        raise ValueError(f"seq_len={S} exceeds num_positions={num_positions}")

    L = S * D
    itemsize = jnp.dtype(x3.dtype).itemsize

    # Lane-dense layout: last dim presented to the kernel is S*D (free reshape,
    # row-major contiguous).
    x_flat = x3.reshape(B, L)
    # Glue: rows 0..S-1 of the table (the arange embedding lookup), cast to x's
    # dtype and flattened to match the lane-dense layout.
    emb_flat = emb_weight[:S, :].astype(x3.dtype).reshape(1, L)

    TB, TL = _choose_tiles(B, L, itemsize)
    # Outer axis = lane tiles, inner axis = batch tiles, so the emb block
    # (constant over batch) stays resident across the inner loop.
    grid = (L // TL, B // TB)

    cost = pl.CostEstimate(
        flops=B * L,
        transcendentals=0,
        bytes_accessed=(2 * B * L + L) * itemsize,
    )

    out_flat = pl.pallas_call(
        _pos_enc_kernel,
        out_shape=jax.ShapeDtypeStruct((B, L), x3.dtype),
        grid_spec=pltpu.PrefetchScalarGridSpec(
            num_scalar_prefetch=0,
            grid=grid,
            in_specs=[
                pl.BlockSpec((TB, TL), lambda j, i: (i, j)),
                pl.BlockSpec((1, TL), lambda j, i: (0, j)),  # constant over batch axis
            ],
            out_specs=pl.BlockSpec((TB, TL), lambda j, i: (i, j)),
        ),
        compiler_params=pltpu.CompilerParams(
            dimension_semantics=("parallel", "parallel"),
        ),
        cost_estimate=cost,
    )(x_flat, emb_flat)

    out = out_flat.reshape(B, S, D)
    return out if batched else out[0]


if __name__ == "__main__":
    # Module config (small, consistent with the forward):
    d_model = 32
    num_positions = 20
    batch = 2
    seq_len = 8

    key = jax.random.PRNGKey(0)
    k_x, k_emb = jax.random.split(key)

    # Deterministic parameter init: nn.Embedding default init is N(0, 1).
    emb_weight = jax.random.normal(k_emb, (num_positions, d_model), dtype=jnp.float32)

    # Batched input: [batch, seq_len, d_model]
    x = jax.random.normal(k_x, (batch, seq_len, d_model), dtype=jnp.float32)

    out = jax.block_until_ready(positional_encoding_forward(x, emb_weight, batched=True))
    ref = x + emb_weight[:seq_len, :][None, :, :]
    assert out.shape == x.shape
    assert jnp.allclose(out, ref, atol=1e-6), "batched mismatch vs reference"

    # Unbatched path: [seq_len, d_model]
    x2 = jax.random.normal(k_x, (seq_len, d_model), dtype=jnp.float32)
    out2 = jax.block_until_ready(positional_encoding_forward(x2, emb_weight, batched=False))
    ref2 = x2 + emb_weight[:seq_len, :]
    assert jnp.allclose(out2, ref2, atol=1e-6), "unbatched mismatch vs reference"

    print("KERNEL_OK")
</pallas_src>

<mosaic_0001>
module attributes {stable_mosaic.version = 11 : i64} {
  func.func @_pos_enc_kernel(%arg0: i32, %arg1: i32, %arg2: memref<2x256xf32, #tpu.memory_space<vmem>>, %arg3: memref<1x256xf32, #tpu.memory_space<vmem>>, %arg4: memref<2x256xf32, #tpu.memory_space<vmem>>) attributes {dimension_semantics = [#tpu.dimension_semantics<parallel>, #tpu.dimension_semantics<parallel>], iteration_bounds = array<i64: 1, 1>, scalar_prefetch = 0 : i64, scratch_operands = 0 : i64, tpu.core_type = #tpu.core_type<tc>, window_params = [{transform_indices = @transform_0, window_bounds = array<i64: 2, 256>}, {transform_indices = @transform_1, window_bounds = array<i64: 1, 256>}, {transform_indices = @transform_2, window_bounds = array<i64: 2, 256>}]} {
    %c0 = arith.constant 0 : index
    %c0_0 = arith.constant 0 : index
    %0 = vector.load %arg2[%c0, %c0_0] : memref<2x256xf32, #tpu.memory_space<vmem>>, vector<2x256xf32>
    %c0_1 = arith.constant 0 : index
    %c0_2 = arith.constant 0 : index
    %1 = vector.load %arg3[%c0_1, %c0_2] : memref<1x256xf32, #tpu.memory_space<vmem>>, vector<1x256xf32>
    %2 = vector.broadcast %1 : vector<1x256xf32> to vector<2x256xf32>
    %3 = arith.addf %0, %2 : vector<2x256xf32>
    %c0_3 = arith.constant 0 : index
    %c0_4 = arith.constant 0 : index
    %4 = vector.load %arg4[%c0_3, %c0_4] : memref<2x256xf32, #tpu.memory_space<vmem>>, vector<2x256xf32>
    tpu.vector_store %arg4[%c0_3, %c0_4], %3 {strides = array<i32>} : memref<2x256xf32, #tpu.memory_space<vmem>>, vector<2x256xf32>,
    return
  }
  func.func @transform_0(%arg0: i32, %arg1: i32) -> (i32, i32) {
    %c0_i32 = arith.constant 0 : i32
    return %arg1, %arg0 : i32, i32
  }
  func.func @transform_1(%arg0: i32, %arg1: i32) -> (i32, i32) {
    %c0_i32 = arith.constant 0 : i32
    %c0_i32_0 = arith.constant 0 : i32
    return %c0_i32, %arg0 : i32, i32
  }
  func.func @transform_2(%arg0: i32, %arg1: i32) -> (i32, i32) {
    %c0_i32 = arith.constant 0 : i32
    return %arg1, %arg0 : i32, i32
  }
}

</mosaic_0001>

<llo_original>
// kernel: positional_encoding_forward.1
$region0: #{positional_encoding_forward.1}
  #allocation0 [shape = 'u32[]', space=smem, size = 0x4, offset = 0x4, fixed_abs, tag = 'smem constant byte address 0x4 - core index']
  #allocation1 [shape = 'u32[144,128]{1,0:T(1,128)}', space=vmem, size = 0x12000, scoped, tag = 'internal scratch']
  %s0 = inlined_call_operand.vmem [shape: f32[2,256], index: 0, kind: input, shape index: {}]
  %s1 = inlined_call_operand.vmem [shape: f32[1,256], index: 1, kind: input, shape index: {}]
  %s2 = inlined_call_operand.vmem [shape: f32[2,256], index: 2, kind: output, shape index: {}]
  %s3 = sld [smem:[#allocation0]]
  $region18: #{positional_encoding_forward.1} parent=0
    _
  %s5 = ssub.s32 1, %s3
  %s6 = scalar_select 0, %s5, %s3
  // Predicated region
  $region2: #{positional_encoding_forward.1} parent=0 // pred_check
    _
  $region3: #{positional_encoding_forward.1} parent=0 // pred_check_branch
    %8 = sbr.rel (0) target = $region5
  $region4: #{positional_encoding_forward.1} parent=0 // pred_region
    _
  $region5: #{positional_encoding_forward.1} parent=0 // pred_fallthru
    _
  // Predicated region
  $region6: #{positional_encoding_forward.1} parent=0 // pred_check
    _
  $region7: #{positional_encoding_forward.1} parent=0 // pred_check_branch
    %10 = sbr.rel (0) target = $region9
  $region8: #{positional_encoding_forward.1} parent=0 // pred_region
    _
  $region9: #{positional_encoding_forward.1} parent=0 // pred_fallthru
    _
  %v11 = vld [vmem:[%s0] sm:$0xf]
  %v12 = vld [vmem:[%s1] sm:$0x3]
  %v14 = vlaneseq
  %v15 = vshrl.u32 %v14, 7
  %v16 = vsub.s32 0, %v15
  %v17 = vrot.slane %v12, %v16
  %v18 = vlaneseq
  %v19 = vshrl.u32 %v18, 7
  %v20 = vsub.s32 1, %v19
  %v21 = vrot.slane %v12, %v20
  %v22 = vcombine.low %v17, %v21
  %v24 = vunpack.c.l.s4 1983009808
  %v25 = vunpack.c.0.s8 %v24
  %v26 = vlaneseq
  %v27 = vshrl.u32 %v26, 7
  %v28 = vsub.s32 %v25, %v27
  %v29 = vrot.slane %v22, %v28
  %v31 = vadd.f32 %v11, %v29
  %32 = vst [vmem:[%s2] sm:$0xf] %v31
  // Predicated region
  $region10: #{positional_encoding_forward.1} parent=0 // pred_check
    _
  $region11: #{positional_encoding_forward.1} parent=0 // pred_check_branch
    %34 = sbr.rel (0) target = $region13
  $region12: #{positional_encoding_forward.1} parent=0 // pred_region
    _
  $region13: #{positional_encoding_forward.1} parent=0 // pred_fallthru
    _
  // Predicated region
  $region14: #{positional_encoding_forward.1} parent=0 // pred_check
    _
  $region15: #{positional_encoding_forward.1} parent=0 // pred_check_branch
    %36 = sbr.rel (0) target = $region17
  $region16: #{positional_encoding_forward.1} parent=0 // pred_region
    _
  $region17: #{positional_encoding_forward.1} parent=0 // pred_fallthru
    _

</llo_original>
